<compile_context>
chip_gen: v7x
topology: tpu7x:2x2x1
jax: 0.10.0
libtpu: 0.0.40
codegen_flags: <defaults>
</compile_context>

<pallas_src>
import functools

import jax
import jax.numpy as jnp
from jax.experimental import pallas as pl
from jax.experimental.pallas import tpu as pltpu


# --------------------------------------------------------------------------- #
# Kernel
# --------------------------------------------------------------------------- #
def _nba_kernel(
    x_ref,
    w1_ref, t1_ref,
    w2_ref, t2_ref,
    w3_ref, t3_ref,
    wh_ref, bh_ref,
    out_ref,
):
    """One batch tile: 3x fused(Linear+BN+ReLU) -> fused(attention+heads)."""
    h = x_ref[...].astype(jnp.bfloat16)

    def layer(h, w_ref, t_ref):
        # bf16 x bf16 MXU matmul with f32 accumulation; bias/ReLU in f32.
        z = jnp.dot(h, w_ref[...], preferred_element_type=jnp.float32) + t_ref[...]
        return jnp.maximum(z, 0.0).astype(jnp.bfloat16)

    h = layer(h, w1_ref, t1_ref)        # (TB, 256)
    h = layer(h, w2_ref, t2_ref)        # (TB, 128)
    feats = layer(h, w3_ref, t3_ref)    # (TB, 64)

    # attention(seq_len==1) + 3 heads collapsed into a single (64, 3) matmul.
    out_ref[...] = (
        jnp.dot(feats, wh_ref[...], preferred_element_type=jnp.float32) + bh_ref[...]
    )


# --------------------------------------------------------------------------- #
# Parameters (PyTorch-convention "raw" params + offline folding for the kernel)
# --------------------------------------------------------------------------- #
def init_params(key, input_dim, hidden_dims=(256, 128, 64)):
    """Raw parameters in nn.Module conventions (Linear weight is (out, in))."""
    p = {}
    keys = iter(jax.random.split(key, 32))
    prev = input_dim
    for li, h in enumerate(hidden_dims, start=1):
        p[f"w{li}"] = jax.random.normal(next(keys), (h, prev), jnp.float32) / jnp.sqrt(prev)
        p[f"b{li}"] = 0.01 * jax.random.normal(next(keys), (h,), jnp.float32)
        p[f"bn_gamma{li}"] = 1.0 + 0.1 * jax.random.normal(next(keys), (h,), jnp.float32)
        p[f"bn_beta{li}"] = 0.05 * jax.random.normal(next(keys), (h,), jnp.float32)
        p[f"bn_mean{li}"] = 0.1 * jax.random.normal(next(keys), (h,), jnp.float32)
        p[f"bn_var{li}"] = jax.random.uniform(next(keys), (h,), jnp.float32, 0.5, 1.5)
        prev = h

    e = hidden_dims[-1]
    # nn.MultiheadAttention: in_proj_weight (3E, E), in_proj_bias (3E,), out_proj (E, E)
    p["in_proj_w"] = jax.random.normal(next(keys), (3 * e, e), jnp.float32) / jnp.sqrt(e)
    p["in_proj_b"] = 0.01 * jax.random.normal(next(keys), (3 * e,), jnp.float32)
    p["out_proj_w"] = jax.random.normal(next(keys), (e, e), jnp.float32) / jnp.sqrt(e)
    p["out_proj_b"] = 0.01 * jax.random.normal(next(keys), (e,), jnp.float32)

    for name in ("points", "rebounds", "assists"):
        p[f"w_{name}"] = jax.random.normal(next(keys), (1, e), jnp.float32) / jnp.sqrt(e)
        p[f"b_{name}"] = 0.01 * jax.random.normal(next(keys), (1,), jnp.float32)
    return p


def prepare_kernel_params(p, eps=1e-5):
    """Fold eval-BN + bias into weights, collapse attention+heads, cast to bf16."""
    kp = {}
    for li in (1, 2, 3):
        w = p[f"w{li}"].T                                     # (in, out)
        b = p[f"b{li}"]
        scale = p[f"bn_gamma{li}"] / jnp.sqrt(p[f"bn_var{li}"] + eps)
        shift = p[f"bn_beta{li}"] - p[f"bn_mean{li}"] * scale
        kp[f"w{li}"] = (w * scale[None, :]).astype(jnp.bfloat16)             # column-scaled
        kp[f"t{li}"] = (b * scale + shift).reshape(1, -1).astype(jnp.float32)

    e = p["out_proj_w"].shape[0]
    wv = p["in_proj_w"][2 * e:3 * e, :].T                     # V projection, (in, out)
    bv = p["in_proj_b"][2 * e:3 * e]
    wo = p["out_proj_w"].T
    bo = p["out_proj_b"]
    wh = jnp.concatenate(
        [p["w_points"].T, p["w_rebounds"].T, p["w_assists"].T], axis=1)      # (E, 3)
    bh = jnp.concatenate([p["b_points"], p["b_rebounds"], p["b_assists"]])   # (3,)

    # seq_len == 1 attention identity: attended = out_proj(V(feats))
    w_fused = wv @ wo @ wh                                    # (E, 3)
    b_fused = bv @ wo @ wh + bo @ wh + bh                     # (3,)
    kp["wh"] = w_fused.astype(jnp.bfloat16)
    kp["bh"] = b_fused.reshape(1, 3).astype(jnp.float32)
    return kp


# --------------------------------------------------------------------------- #
# Wrapper
# --------------------------------------------------------------------------- #
@functools.partial(jax.jit, static_argnames=("block_b",))
def nba_deep_model_forward(x, kparams, *, block_b=1024):
    B, D = x.shape
    tb = min(block_b, B)                  # batch tile (rows per grid step)
    grid = (pl.cdiv(B, tb),)

    def row_spec(width):                  # streamed per grid step
        return pl.BlockSpec((tb, width), lambda i: (i, 0))

    def resident_spec(arr):               # constant block index -> fetched once
        return pl.BlockSpec(arr.shape, lambda i: (0, 0))

    args = [
        x,
        kparams["w1"], kparams["t1"],
        kparams["w2"], kparams["t2"],
        kparams["w3"], kparams["t3"],
        kparams["wh"], kparams["bh"],
    ]
    in_specs = [row_spec(D)] + [resident_spec(a) for a in args[1:]]

    out = pl.pallas_call(
        _nba_kernel,
        out_shape=jax.ShapeDtypeStruct((B, 3), jnp.float32),
        grid=grid,
        in_specs=in_specs,
        out_specs=pl.BlockSpec((tb, 3), lambda i: (i, 0)),
        compiler_params=pltpu.CompilerParams(
            dimension_semantics=("parallel",)),   # megacore split on v7x
    )(*args)

    return {
        "points": out[:, 0:1],
        "rebounds": out[:, 1:2],
        "assists": out[:, 2:3],
    }


# --------------------------------------------------------------------------- #
# Pure-JAX f32 reference of the original (eval-mode) PyTorch forward
# --------------------------------------------------------------------------- #
def _reference_forward(x, p, hidden_dims=(256, 128, 64), num_heads=4, eps=1e-5):
    h = x
    for li in (1, 2, 3):
        z = h @ p[f"w{li}"].T + p[f"b{li}"]
        z = (z - p[f"bn_mean{li}"]) / jnp.sqrt(p[f"bn_var{li}"] + eps)
        z = z * p[f"bn_gamma{li}"] + p[f"bn_beta{li}"]
        h = jnp.maximum(z, 0.0)                    # Dropout is identity in eval
    feats = h                                      # (B, E); seq dim has length 1
    e = hidden_dims[-1]
    hd = e // num_heads

    qkv = feats @ p["in_proj_w"].T + p["in_proj_b"]
    q, k, v = qkv[:, :e], qkv[:, e:2 * e], qkv[:, 2 * e:]
    qh = q.reshape(-1, num_heads, 1, hd)
    kh = k.reshape(-1, num_heads, 1, hd)
    vh = v.reshape(-1, num_heads, 1, hd)
    scores = (qh @ jnp.swapaxes(kh, -1, -2)) / jnp.sqrt(hd)   # (B, H, 1, 1)
    attn = jax.nn.softmax(scores, axis=-1)                    # == 1.0 (seq_len 1)
    ctx = (attn @ vh).reshape(-1, e)
    att = ctx @ p["out_proj_w"].T + p["out_proj_b"]
    return {
        "points": att @ p["w_points"].T + p["b_points"],
        "rebounds": att @ p["w_rebounds"].T + p["b_rebounds"],
        "assists": att @ p["w_assists"].T + p["b_assists"],
    }


if __name__ == "__main__":
    B = 8
    INPUT_DIM = 32

    key = jax.random.PRNGKey(0)
    kx, kp = jax.random.split(key)
    x = jax.random.normal(kx, (B, INPUT_DIM), jnp.float32)

    raw_params = init_params(kp, INPUT_DIM)
    kernel_params = prepare_kernel_params(raw_params)

    outputs = nba_deep_model_forward(x, kernel_params)
    outputs = jax.block_until_ready(outputs)

    assert outputs["points"].shape == (B, 1)
    assert outputs["rebounds"].shape == (B, 1)
    assert outputs["assists"].shape == (B, 1)

    ref = _reference_forward(x, raw_params)
    got = jnp.concatenate(
        [outputs["points"], outputs["rebounds"], outputs["assists"]], axis=1)
    want = jnp.concatenate(
        [ref["points"], ref["rebounds"], ref["assists"]], axis=1)
    # bf16 MXU operands (f32 accumulate) + algebraic refactoring change rounding only.
    assert jnp.allclose(got, want, rtol=5e-2, atol=5e-2), "mismatch vs f32 reference"

    print("KERNEL_OK")
</pallas_src>

<mosaic_0001>
module attributes {stable_mosaic.version = 11 : i64} {
  func.func @_nba_kernel(%arg0: i32, %arg1: memref<8x32xf32, #tpu.memory_space<vmem>>, %arg2: memref<32x256xbf16, #tpu.memory_space<vmem>>, %arg3: memref<1x256xf32, #tpu.memory_space<vmem>>, %arg4: memref<256x128xbf16, #tpu.memory_space<vmem>>, %arg5: memref<1x128xf32, #tpu.memory_space<vmem>>, %arg6: memref<128x64xbf16, #tpu.memory_space<vmem>>, %arg7: memref<1x64xf32, #tpu.memory_space<vmem>>, %arg8: memref<64x3xbf16, #tpu.memory_space<vmem>>, %arg9: memref<1x3xf32, #tpu.memory_space<vmem>>, %arg10: memref<8x3xf32, #tpu.memory_space<vmem>>) attributes {dimension_semantics = [#tpu.dimension_semantics<parallel>], iteration_bounds = array<i64: 1>, scalar_prefetch = 0 : i64, scratch_operands = 0 : i64, tpu.core_type = #tpu.core_type<tc>, window_params = [{transform_indices = @transform_0, window_bounds = array<i64: 8, 32>}, {pipeline_mode = #tpu.pipeline_mode<synchronous>, transform_indices = @transform_1, window_bounds = array<i64: 32, 256>}, {pipeline_mode = #tpu.pipeline_mode<synchronous>, transform_indices = @transform_2, window_bounds = array<i64: 1, 256>}, {pipeline_mode = #tpu.pipeline_mode<synchronous>, transform_indices = @transform_3, window_bounds = array<i64: 256, 128>}, {pipeline_mode = #tpu.pipeline_mode<synchronous>, transform_indices = @transform_4, window_bounds = array<i64: 1, 128>}, {pipeline_mode = #tpu.pipeline_mode<synchronous>, transform_indices = @transform_5, window_bounds = array<i64: 128, 64>}, {pipeline_mode = #tpu.pipeline_mode<synchronous>, transform_indices = @transform_6, window_bounds = array<i64: 1, 64>}, {pipeline_mode = #tpu.pipeline_mode<synchronous>, transform_indices = @transform_7, window_bounds = array<i64: 64, 3>}, {pipeline_mode = #tpu.pipeline_mode<synchronous>, transform_indices = @transform_8, window_bounds = array<i64: 1, 3>}, {transform_indices = @transform_9, window_bounds = array<i64: 8, 3>}]} {
    %c0 = arith.constant 0 : index
    %c0_0 = arith.constant 0 : index
    %0 = vector.load %arg1[%c0, %c0_0] : memref<8x32xf32, #tpu.memory_space<vmem>>, vector<8x32xf32>
    %1 = arith.truncf %0 : vector<8x32xf32> to vector<8x32xbf16>
    %c0_1 = arith.constant 0 : index
    %c0_2 = arith.constant 0 : index
    %2 = vector.load %arg2[%c0_1, %c0_2] : memref<32x256xbf16, #tpu.memory_space<vmem>>, vector<32x256xbf16>
    %cst = arith.constant dense<0.000000e+00> : vector<8x256xf32>
    %3 = tpu.matmul %1, %2, %cst {dimension_numbers = #tpu.dot_dimension_numbers<[1], [0], [0], [1], [0, 0, 1, 1], [], []>} : vector<8x32xbf16>, vector<32x256xbf16>, vector<8x256xf32> -> vector<8x256xf32>
    %c0_3 = arith.constant 0 : index
    %c0_4 = arith.constant 0 : index
    %4 = vector.load %arg3[%c0_3, %c0_4] : memref<1x256xf32, #tpu.memory_space<vmem>>, vector<1x256xf32>
    %5 = vector.broadcast %4 : vector<1x256xf32> to vector<8x256xf32>
    %6 = arith.addf %3, %5 : vector<8x256xf32>
    %cst_5 = arith.constant 0.000000e+00 : f32
    %7 = vector.broadcast %cst_5 : f32 to vector<8x256xf32>
    %8 = arith.maximumf %6, %7 : vector<8x256xf32>
    %9 = arith.truncf %8 : vector<8x256xf32> to vector<8x256xbf16>
    %c0_6 = arith.constant 0 : index
    %c0_7 = arith.constant 0 : index
    %10 = vector.load %arg4[%c0_6, %c0_7] : memref<256x128xbf16, #tpu.memory_space<vmem>>, vector<256x128xbf16>
    %cst_8 = arith.constant dense<0.000000e+00> : vector<8x128xf32>
    %11 = tpu.matmul %9, %10, %cst_8 {dimension_numbers = #tpu.dot_dimension_numbers<[1], [0], [0], [1], [0, 0, 1, 1], [], []>} : vector<8x256xbf16>, vector<256x128xbf16>, vector<8x128xf32> -> vector<8x128xf32>
    %c0_9 = arith.constant 0 : index
    %c0_10 = arith.constant 0 : index
    %12 = vector.load %arg5[%c0_9, %c0_10] : memref<1x128xf32, #tpu.memory_space<vmem>>, vector<1x128xf32>
    %13 = vector.broadcast %12 : vector<1x128xf32> to vector<8x128xf32>
    %14 = arith.addf %11, %13 : vector<8x128xf32>
    %cst_11 = arith.constant 0.000000e+00 : f32
    %15 = vector.broadcast %cst_11 : f32 to vector<8x128xf32>
    %16 = arith.maximumf %14, %15 : vector<8x128xf32>
    %17 = arith.truncf %16 : vector<8x128xf32> to vector<8x128xbf16>
    %c0_12 = arith.constant 0 : index
    %c0_13 = arith.constant 0 : index
    %18 = vector.load %arg6[%c0_12, %c0_13] : memref<128x64xbf16, #tpu.memory_space<vmem>>, vector<128x64xbf16>
    %cst_14 = arith.constant dense<0.000000e+00> : vector<8x64xf32>
    %19 = tpu.matmul %17, %18, %cst_14 {dimension_numbers = #tpu.dot_dimension_numbers<[1], [0], [0], [1], [0, 0, 1, 1], [], []>} : vector<8x128xbf16>, vector<128x64xbf16>, vector<8x64xf32> -> vector<8x64xf32>
    %c0_15 = arith.constant 0 : index
    %c0_16 = arith.constant 0 : index
    %20 = vector.load %arg7[%c0_15, %c0_16] : memref<1x64xf32, #tpu.memory_space<vmem>>, vector<1x64xf32>
    %21 = vector.broadcast %20 : vector<1x64xf32> to vector<8x64xf32>
    %22 = arith.addf %19, %21 : vector<8x64xf32>
    %cst_17 = arith.constant 0.000000e+00 : f32
    %23 = vector.broadcast %cst_17 : f32 to vector<8x64xf32>
    %24 = arith.maximumf %22, %23 : vector<8x64xf32>
    %25 = arith.truncf %24 : vector<8x64xf32> to vector<8x64xbf16>
    %c0_18 = arith.constant 0 : index
    %c0_19 = arith.constant 0 : index
    %26 = vector.load %arg8[%c0_18, %c0_19] : memref<64x3xbf16, #tpu.memory_space<vmem>>, vector<64x3xbf16>
    %cst_20 = arith.constant dense<0.000000e+00> : vector<8x3xf32>
    %27 = tpu.matmul %25, %26, %cst_20 {dimension_numbers = #tpu.dot_dimension_numbers<[1], [0], [0], [1], [0, 0, 1, 1], [], []>} : vector<8x64xbf16>, vector<64x3xbf16>, vector<8x3xf32> -> vector<8x3xf32>
    %c0_21 = arith.constant 0 : index
    %c0_22 = arith.constant 0 : index
    %28 = vector.load %arg9[%c0_21, %c0_22] : memref<1x3xf32, #tpu.memory_space<vmem>>, vector<1x3xf32>
    %29 = vector.broadcast %28 : vector<1x3xf32> to vector<8x3xf32>
    %30 = arith.addf %27, %29 : vector<8x3xf32>
    %c0_23 = arith.constant 0 : index
    %c0_24 = arith.constant 0 : index
    %31 = vector.load %arg10[%c0_23, %c0_24] : memref<8x3xf32, #tpu.memory_space<vmem>>, vector<8x3xf32>
    tpu.vector_store %arg10[%c0_23, %c0_24], %30 {strides = array<i32>} : memref<8x3xf32, #tpu.memory_space<vmem>>, vector<8x3xf32>,
    return
  }
  func.func @transform_0(%arg0: i32) -> (i32, i32) {
    %c0_i32 = arith.constant 0 : i32
    %c0_i32_0 = arith.constant 0 : i32
    return %arg0, %c0_i32 : i32, i32
  }
  func.func @transform_1(%arg0: i32) -> (i32, i32) {
    %c0_i32 = arith.constant 0 : i32
    %c0_i32_0 = arith.constant 0 : i32
    %c0_i32_1 = arith.constant 0 : i32
    return %c0_i32, %c0_i32_0 : i32, i32
  }
  func.func @transform_2(%arg0: i32) -> (i32, i32) {
    %c0_i32 = arith.constant 0 : i32
    %c0_i32_0 = arith.constant 0 : i32
    %c0_i32_1 = arith.constant 0 : i32
    return %c0_i32, %c0_i32_0 : i32, i32
  }
  func.func @transform_3(%arg0: i32) -> (i32, i32) {
    %c0_i32 = arith.constant 0 : i32
    %c0_i32_0 = arith.constant 0 : i32
    %c0_i32_1 = arith.constant 0 : i32
    return %c0_i32, %c0_i32_0 : i32, i32
  }
  func.func @transform_4(%arg0: i32) -> (i32, i32) {
    %c0_i32 = arith.constant 0 : i32
    %c0_i32_0 = arith.constant 0 : i32
    %c0_i32_1 = arith.constant 0 : i32
    return %c0_i32, %c0_i32_0 : i32, i32
  }
  func.func @transform_5(%arg0: i32) -> (i32, i32) {
    %c0_i32 = arith.constant 0 : i32
    %c0_i32_0 = arith.constant 0 : i32
    %c0_i32_1 = arith.constant 0 : i32
    return %c0_i32, %c0_i32_0 : i32, i32
  }
  func.func @transform_6(%arg0: i32) -> (i32, i32) {
    %c0_i32 = arith.constant 0 : i32
    %c0_i32_0 = arith.constant 0 : i32
    %c0_i32_1 = arith.constant 0 : i32
    return %c0_i32, %c0_i32_0 : i32, i32
  }
  func.func @transform_7(%arg0: i32) -> (i32, i32) {
    %c0_i32 = arith.constant 0 : i32
    %c0_i32_0 = arith.constant 0 : i32
    %c0_i32_1 = arith.constant 0 : i32
    return %c0_i32, %c0_i32_0 : i32, i32
  }
  func.func @transform_8(%arg0: i32) -> (i32, i32) {
    %c0_i32 = arith.constant 0 : i32
    %c0_i32_0 = arith.constant 0 : i32
    %c0_i32_1 = arith.constant 0 : i32
    return %c0_i32, %c0_i32_0 : i32, i32
  }
  func.func @transform_9(%arg0: i32) -> (i32, i32) {
    %c0_i32 = arith.constant 0 : i32
    %c0_i32_0 = arith.constant 0 : i32
    return %arg0, %c0_i32 : i32, i32
  }
}

</mosaic_0001>

<llo_original>
// kernel: nba_deep_model_forward.1
$region0: #{nba_deep_model_forward.1}
  #allocation0 [shape = 'u32[]', space=smem, size = 0x4, offset = 0x4, fixed_abs, tag = 'smem constant byte address 0x4 - core index']
  #allocation1 [shape = 'u32[144,128]{1,0:T(1,128)}', space=vmem, size = 0x12000, scoped, tag = 'internal scratch']
  %s0 = inlined_call_operand.vmem [shape: f32[8,32], index: 0, kind: input, shape index: {}]
  %s1 = inlined_call_operand.hbm [shape: bf16[32,256], index: 1, kind: input, shape index: {}]
  %s2 = inlined_call_operand.vmem [shape: f32[1,256], index: 2, kind: input, shape index: {}]
  %s3 = inlined_call_operand.vmem [shape: bf16[256,128], index: 3, kind: input, shape index: {}]
  %s4 = inlined_call_operand.vmem [shape: f32[1,128], index: 4, kind: input, shape index: {}]
  %s5 = inlined_call_operand.vmem [shape: bf16[128,64], index: 5, kind: input, shape index: {}]
  %s6 = inlined_call_operand.vmem [shape: f32[1,64], index: 6, kind: input, shape index: {}]
  %s7 = inlined_call_operand.vmem [shape: bf16[64,3], index: 7, kind: input, shape index: {}]
  %s8 = inlined_call_operand.vmem [shape: f32[1,3], index: 8, kind: input, shape index: {}]
  %s9 = inlined_call_operand.vmem [shape: f32[8,3], index: 9, kind: output, shape index: {}]
  %s10 = sld [smem:[#allocation0]]
  $region50: #{nba_deep_model_forward.1} parent=0
    _
  %s12 = ssub.s32 1, %s10
  %s13 = scalar_select 0, %s12, %s10
  $region1: #{nba_deep_model_forward.1} parent=0
    #allocation2 [shape = 'u8[16384]{0}', space=vmem, size = 0x4000, scoped, tag = 'input window, operand 1, single buffered']
    #allocation3 [shape = 's32[1]{0}', space=sflag, size = 0x4, scoped, tag = 'scoped memory for nba_deep_model_forward.1']
    %14 = vsyncpa [#allocation3], 0
    // Predicated region
    $region2: #{nba_deep_model_forward.1} parent=1 // pred_check
      _
    $region3: #{nba_deep_model_forward.1} parent=1 // pred_check_branch
      %16 = sbr.rel (0) target = $region5
    $region4: #{nba_deep_model_forward.1} parent=1 // pred_region
      _
    $region5: #{nba_deep_model_forward.1} parent=1 // pred_fallthru
      _
    // Predicated region
    $region6: #{nba_deep_model_forward.1} parent=1 // pred_check
      _
    $region7: #{nba_deep_model_forward.1} parent=1 // pred_check_branch
      %18 = sbr.rel (0) target = $region9
    $region8: #{nba_deep_model_forward.1} parent=1 // pred_region
      %s20 = ssub.s32 512, 512
      %21 = vsyncadd [#allocation3], %s20
      %s22 = sshll.u32 [#allocation2], 4
      %s23 = int_to_ptr.vmem [resolvable:$true] %s22
      %28 = dma.hbm_to_vmem [thread:$0]  %s1, 512, %s23, [#allocation3], 128, 128, 8
    $region9: #{nba_deep_model_forward.1} parent=1 // pred_fallthru
      _
    // Predicated region
    $region10: #{nba_deep_model_forward.1} parent=1 // pred_check
      _
    $region11: #{nba_deep_model_forward.1} parent=1 // pred_check_branch
      %30 = sbr.rel (0) target = $region13
    $region12: #{nba_deep_model_forward.1} parent=1 // pred_region
      _
    $region13: #{nba_deep_model_forward.1} parent=1 // pred_fallthru
      _
    // Predicated region
    $region14: #{nba_deep_model_forward.1} parent=1 // pred_check
      _
    $region15: #{nba_deep_model_forward.1} parent=1 // pred_check_branch
      %32 = sbr.rel (0) target = $region17
    $region16: #{nba_deep_model_forward.1} parent=1 // pred_region
      _
    $region17: #{nba_deep_model_forward.1} parent=1 // pred_fallthru
      _
    // Predicated region
    $region18: #{nba_deep_model_forward.1} parent=1 // pred_check
      _
    $region19: #{nba_deep_model_forward.1} parent=1 // pred_check_branch
      %34 = sbr.rel (0) target = $region21
    $region20: #{nba_deep_model_forward.1} parent=1 // pred_region
      _
    $region21: #{nba_deep_model_forward.1} parent=1 // pred_fallthru
      _
    // Predicated region
    $region22: #{nba_deep_model_forward.1} parent=1 // pred_check
      _
    $region23: #{nba_deep_model_forward.1} parent=1 // pred_check_branch
      %36 = sbr.rel (0) target = $region25
    $region24: #{nba_deep_model_forward.1} parent=1 // pred_region
      _
    $region25: #{nba_deep_model_forward.1} parent=1 // pred_fallthru
      _
    // Predicated region
    $region26: #{nba_deep_model_forward.1} parent=1 // pred_check
      _
    $region27: #{nba_deep_model_forward.1} parent=1 // pred_check_branch
      %38 = sbr.rel (0) target = $region29
    $region28: #{nba_deep_model_forward.1} parent=1 // pred_region
      _
    $region29: #{nba_deep_model_forward.1} parent=1 // pred_fallthru
      _
    // Predicated region
    $region30: #{nba_deep_model_forward.1} parent=1 // pred_check
      _
    $region31: #{nba_deep_model_forward.1} parent=1 // pred_check_branch
      %40 = sbr.rel (0) target = $region33
    $region32: #{nba_deep_model_forward.1} parent=1 // pred_region
      _
    $region33: #{nba_deep_model_forward.1} parent=1 // pred_fallthru
      _
    // Predicated region
    $region34: #{nba_deep_model_forward.1} parent=1 // pred_check
      _
    $region35: #{nba_deep_model_forward.1} parent=1 // pred_check_branch
      %42 = sbr.rel (0) target = $region37
    $region36: #{nba_deep_model_forward.1} parent=1 // pred_region
      _
    $region37: #{nba_deep_model_forward.1} parent=1 // pred_fallthru
      _
    // Predicated region
    $region38: #{nba_deep_model_forward.1} parent=1 // pred_check
      _
    $region39: #{nba_deep_model_forward.1} parent=1 // pred_check_branch
      %44 = sbr.rel (0) target = $region41
    $region40: #{nba_deep_model_forward.1} parent=1 // pred_region
      %45 = dma.done [#allocation3], 512
    $region41: #{nba_deep_model_forward.1} parent=1 // pred_fallthru
      _
    %v47 = vld [vmem:[%s0] sm:$0xff]
    %v48 = vpack.c.bf16 %v47, %v47
    %v49 = vld [vmem:[#allocation2] sm:$0xff]
    %v50 = vld [vmem:[#allocation2 + $0x8] sm:$0xff]
    %v51 = vld [vmem:[#allocation2 + $0x10] sm:$0xff]
    %v52 = vld [vmem:[#allocation2 + $0x18] sm:$0xff]
    %v53 = vld [vmem:[%s2] sm:$0x3]
    %v55 = vlaneseq
    %v56 = vshrl.u32 %v55, 7
    %v57 = vsub.s32 0, %v56
    %v58 = vrot.slane %v53, %v57
    %v59 = vlaneseq
    %v60 = vshrl.u32 %v59, 7
    %v61 = vsub.s32 1, %v60
    %v62 = vrot.slane %v53, %v61
    %v69 = vunpack.c.l.b16 %v49
    %v70 = vunpack.c.h.b16 %v49
    %v71 = vunpack.c.l.b16 %v50
    %v72 = vunpack.c.h.b16 %v50
    %v73 = vunpack.c.l.b16 %v51
    %v74 = vunpack.c.h.b16 %v51
    %v75 = vunpack.c.l.b16 %v52
    %v76 = vunpack.c.h.b16 %v52
    %v77 = vpack.c.b16 %v71, %v69
    %v78 = vpack.c.b16 %v72, %v70
    %v79 = vpack.c.b16 %v75, %v73
    %v80 = vpack.c.b16 %v76, %v74
    %vm85 = vcmask 261120
    %v87 = vsel %vm85, %v48, 0
    %89 = vmatprep.subr.bf16.mxu0 %v78
    %90 = vmatpush1.bf16.msra.mxu0 %v77
    %91 = vmatprep.subr.bf16.mxu0 %v80
    %92 = vmatpush1.bf16.msra.mxu0 %v79
    %93 = vmatprep.subr.bf16.mxu0 0
    %94 = vmatpush1.bf16.msra.mxu0 0
    %95 = vmatprep.subr.bf16.mxu0 0
    %96 = vmatpush1.bf16.msra.mxu0 0
    %97 = vmatprep.subr.bf16.mxu0 0
    %98 = vmatpush1.bf16.msra.mxu0 0
    %99 = vmatprep.subr.bf16.mxu0 0
    %100 = vmatpush1.bf16.msra.mxu0 0
    %101 = vmatprep.subr.bf16.mxu0 0
    %102 = vmatpush1.bf16.msra.mxu0 0
    %103 = vmatprep.subr.bf16.mxu0 0
    %104 = vmatpush1.bf16.msra.mxu0 0
    %105 = vmatprep.subr.bf16.mxu0 0
    %106 = vmatpush1.bf16.msra.mxu0 0
    %107 = vmatprep.subr.bf16.mxu0 0
    %108 = vmatpush1.bf16.msra.mxu0 0
    %109 = vmatprep.subr.bf16.mxu0 0
    %110 = vmatpush1.bf16.msra.mxu0 0
    %111 = vmatprep.subr.bf16.mxu0 0
    %112 = vmatpush1.bf16.msra.mxu0 0
    %113 = vmatprep.subr.bf16.mxu0 0
    %114 = vmatpush1.bf16.msra.mxu0 0
    %115 = vmatprep.subr.bf16.mxu0 0
    %116 = vmatpush1.bf16.msra.mxu0 0
    %117 = vmatprep.subr.bf16.mxu0 0
    %118 = vmatpush1.bf16.msra.mxu0 0
    %119 = vmatprep.subr.bf16.mxu0 0
    %120 = vmatpush1.bf16.msra.mxu0 0
    %121 = vmatprep.mubr.bf16.mxu0 0
    %122 = vmatmul.mubr.bf16.gmra.mrb[0].mxu0 %v87
    %v123 = vpop.f32.mrb[0].mxu0
    %v124 = vadd.f32 %v58, %v123
    %v125 = vpop.f32.mrb[0].mxu0
    %v126 = vadd.f32 %v62, %v125
    %v127 = vpop.f32.mrb[0].mxu0
    %v128 = vpop.f32.mrb[0].mxu0
    %129 = vdwg.mxu0
    %v130 = vmax.f32 %v124, 0.0
    %v131 = vmax.f32 %v126, 0.0
    %v132 = vpack.c.bf16 %v130, %v130
    %v133 = vpack.c.bf16 %v131, %v131
    %v134 = vld [vmem:[%s3] sm:$0xf]
    %v135 = vld [vmem:[%s3 + $0x4] sm:$0xf]
    %v136 = vld [vmem:[%s3 + $0x8] sm:$0xf]
    %v137 = vld [vmem:[%s3 + $0xc] sm:$0xf]
    %v138 = vld [vmem:[%s3 + $0x10] sm:$0xf]
    %v139 = vld [vmem:[%s3 + $0x14] sm:$0xf]
    %v140 = vld [vmem:[%s3 + $0x18] sm:$0xf]
    %v141 = vld [vmem:[%s3 + $0x1c] sm:$0xf]
    %v142 = vld [vmem:[%s3 + $0x20] sm:$0xf]
    %v143 = vld [vmem:[%s3 + $0x24] sm:$0xf]
    %v144 = vld [vmem:[%s3 + $0x28] sm:$0xf]
    %v145 = vld [vmem:[%s3 + $0x2c] sm:$0xf]
    %v146 = vld [vmem:[%s3 + $0x30] sm:$0xf]
    %v147 = vld [vmem:[%s3 + $0x34] sm:$0xf]
    %v148 = vld [vmem:[%s3 + $0x38] sm:$0xf]
    %v149 = vld [vmem:[%s3 + $0x3c] sm:$0xf]
    %v150 = vld [vmem:[%s3 + $0x40] sm:$0xf]
    %v151 = vld [vmem:[%s3 + $0x44] sm:$0xf]
    %v152 = vld [vmem:[%s3 + $0x48] sm:$0xf]
    %v153 = vld [vmem:[%s3 + $0x4c] sm:$0xf]
    %v154 = vld [vmem:[%s3 + $0x50] sm:$0xf]
    %v155 = vld [vmem:[%s3 + $0x54] sm:$0xf]
    %v156 = vld [vmem:[%s3 + $0x58] sm:$0xf]
    %v157 = vld [vmem:[%s3 + $0x5c] sm:$0xf]
    %v158 = vld [vmem:[%s3 + $0x60] sm:$0xf]
    %v159 = vld [vmem:[%s3 + $0x64] sm:$0xf]
    %v160 = vld [vmem:[%s3 + $0x68] sm:$0xf]
    %v161 = vld [vmem:[%s3 + $0x6c] sm:$0xf]
    %v162 = vld [vmem:[%s3 + $0x70] sm:$0xf]
    %v163 = vld [vmem:[%s3 + $0x74] sm:$0xf]
    %v164 = vld [vmem:[%s3 + $0x78] sm:$0xf]
    %v165 = vld [vmem:[%s3 + $0x7c] sm:$0xf]
    %v166 = vld [vmem:[%s4] sm:$0x1]
    %v168 = vlaneseq
    %v169 = vshrl.u32 %v168, 7
    %v170 = vsub.s32 0, %v169
    %v171 = vrot.slane %v166, %v170
    %v205 = vunpack.c.l.b16 %v134
    %v206 = vunpack.c.l.b16 %v135
    %v207 = vunpack.c.l.b16 %v136
    %v208 = vunpack.c.l.b16 %v137
    %v209 = vunpack.c.l.b16 %v138
    %v210 = vunpack.c.l.b16 %v139
    %v211 = vunpack.c.l.b16 %v140
    %v212 = vunpack.c.l.b16 %v141
    %v213 = vunpack.c.l.b16 %v142
    %v214 = vunpack.c.l.b16 %v143
    %v215 = vunpack.c.l.b16 %v144
    %v216 = vunpack.c.l.b16 %v145
    %v217 = vunpack.c.l.b16 %v146
    %v218 = vunpack.c.l.b16 %v147
    %v219 = vunpack.c.l.b16 %v148
    %v220 = vunpack.c.l.b16 %v149
    %v221 = vunpack.c.l.b16 %v150
    %v222 = vunpack.c.l.b16 %v151
    %v223 = vunpack.c.l.b16 %v152
    %v224 = vunpack.c.l.b16 %v153
    %v225 = vunpack.c.l.b16 %v154
    %v226 = vunpack.c.l.b16 %v155
    %v227 = vunpack.c.l.b16 %v156
    %v228 = vunpack.c.l.b16 %v157
    %v229 = vunpack.c.l.b16 %v158
    %v230 = vunpack.c.l.b16 %v159
    %v231 = vunpack.c.l.b16 %v160
    %v232 = vunpack.c.l.b16 %v161
    %v233 = vunpack.c.l.b16 %v162
    %v234 = vunpack.c.l.b16 %v163
    %v235 = vunpack.c.l.b16 %v164
    %v236 = vunpack.c.l.b16 %v165
    %v237 = vpack.c.b16 %v206, %v205
    %v238 = vpack.c.b16 %v208, %v207
    %v239 = vpack.c.b16 %v210, %v209
    %v240 = vpack.c.b16 %v212, %v211
    %v241 = vpack.c.b16 %v214, %v213
    %v242 = vpack.c.b16 %v216, %v215
    %v243 = vpack.c.b16 %v218, %v217
    %v244 = vpack.c.b16 %v220, %v219
    %v245 = vpack.c.b16 %v222, %v221
    %v246 = vpack.c.b16 %v224, %v223
    %v247 = vpack.c.b16 %v226, %v225
    %v248 = vpack.c.b16 %v228, %v227
    %v249 = vpack.c.b16 %v230, %v229
    %v250 = vpack.c.b16 %v232, %v231
    %v251 = vpack.c.b16 %v234, %v233
    %v252 = vpack.c.b16 %v236, %v235
    %269 = vmatprep.subr.bf16.mxu0 0
    %270 = vmatpush1.bf16.msra.mxu0 %v237
    %271 = vmatprep.subr.bf16.mxu0 0
    %272 = vmatpush1.bf16.msra.mxu0 %v238
    %273 = vmatprep.subr.bf16.mxu0 0
    %274 = vmatpush1.bf16.msra.mxu0 %v239
    %275 = vmatprep.subr.bf16.mxu0 0
    %276 = vmatpush1.bf16.msra.mxu0 %v240
    %277 = vmatprep.subr.bf16.mxu0 0
    %278 = vmatpush1.bf16.msra.mxu0 %v241
    %279 = vmatprep.subr.bf16.mxu0 0
    %280 = vmatpush1.bf16.msra.mxu0 %v242
    %281 = vmatprep.subr.bf16.mxu0 0
    %282 = vmatpush1.bf16.msra.mxu0 %v243
    %283 = vmatprep.subr.bf16.mxu0 0
    %284 = vmatpush1.bf16.msra.mxu0 %v244
    %285 = vmatprep.subr.bf16.mxu0 0
    %286 = vmatpush1.bf16.msra.mxu0 %v245
    %287 = vmatprep.subr.bf16.mxu0 0
    %288 = vmatpush1.bf16.msra.mxu0 %v246
    %289 = vmatprep.subr.bf16.mxu0 0
    %290 = vmatpush1.bf16.msra.mxu0 %v247
    %291 = vmatprep.subr.bf16.mxu0 0
    %292 = vmatpush1.bf16.msra.mxu0 %v248
    %293 = vmatprep.subr.bf16.mxu0 0
    %294 = vmatpush1.bf16.msra.mxu0 %v249
    %295 = vmatprep.subr.bf16.mxu0 0
    %296 = vmatpush1.bf16.msra.mxu0 %v250
    %297 = vmatprep.subr.bf16.mxu0 0
    %298 = vmatpush1.bf16.msra.mxu0 %v251
    %299 = vmatprep.subr.bf16.mxu0 0
    %300 = vmatpush1.bf16.msra.mxu0 %v252
    %301 = vmatprep.mubr.bf16.mxu0 %v133
    %302 = vmatmul.mubr.bf16.gmra.mrb[0].mxu0 %v132
    %v303 = vpop.f32.mrb[0].mxu0
    %v304 = vadd.f32 %v171, %v303
    %v305 = vpop.f32.mrb[0].mxu0
    %v306 = vpop.f32.mrb[0].mxu0
    %v307 = vpop.f32.mrb[0].mxu0
    %308 = vdwg.mxu0
    %v309 = vmax.f32 %v304, 0.0
    %v310 = vpack.c.bf16 %v309, %v309
    %v311 = vld [vmem:[%s5] sm:$0xf]
    %v312 = vld [vmem:[%s5 + $0x4] sm:$0xf]
    %v313 = vld [vmem:[%s5 + $0x8] sm:$0xf]
    %v314 = vld [vmem:[%s5 + $0xc] sm:$0xf]
    %v315 = vld [vmem:[%s5 + $0x10] sm:$0xf]
    %v316 = vld [vmem:[%s5 + $0x14] sm:$0xf]
    %v317 = vld [vmem:[%s5 + $0x18] sm:$0xf]
    %v318 = vld [vmem:[%s5 + $0x1c] sm:$0xf]
    %v319 = vld [vmem:[%s5 + $0x20] sm:$0xf]
    %v320 = vld [vmem:[%s5 + $0x24] sm:$0xf]
    %v321 = vld [vmem:[%s5 + $0x28] sm:$0xf]
    %v322 = vld [vmem:[%s5 + $0x2c] sm:$0xf]
    %v323 = vld [vmem:[%s5 + $0x30] sm:$0xf]
    %v324 = vld [vmem:[%s5 + $0x34] sm:$0xf]
    %v325 = vld [vmem:[%s5 + $0x38] sm:$0xf]
    %v326 = vld [vmem:[%s5 + $0x3c] sm:$0xf]
    %v327 = vld [vmem:[%s6] sm:$0x1]
    %v329 = vlaneseq
    %v330 = vshrl.u32 %v329, 7
    %v331 = vsub.s32 0, %v330
    %v332 = vrot.slane %v327, %v331
    %v350 = vunpack.c.l.b16 %v311
    %v351 = vunpack.c.l.b16 %v312
    %v352 = vunpack.c.l.b16 %v313
    %v353 = vunpack.c.l.b16 %v314
    %v354 = vunpack.c.l.b16 %v315
    %v355 = vunpack.c.l.b16 %v316
    %v356 = vunpack.c.l.b16 %v317
    %v357 = vunpack.c.l.b16 %v318
    %v358 = vunpack.c.l.b16 %v319
    %v359 = vunpack.c.l.b16 %v320
    %v360 = vunpack.c.l.b16 %v321
    %v361 = vunpack.c.l.b16 %v322
    %v362 = vunpack.c.l.b16 %v323
    %v363 = vunpack.c.l.b16 %v324
    %v364 = vunpack.c.l.b16 %v325
    %v365 = vunpack.c.l.b16 %v326
    %v366 = vpack.c.b16 %v351, %v350
    %v367 = vpack.c.b16 %v353, %v352
    %v368 = vpack.c.b16 %v355, %v354
    %v369 = vpack.c.b16 %v357, %v356
    %v370 = vpack.c.b16 %v359, %v358
    %v371 = vpack.c.b16 %v361, %v360
    %v372 = vpack.c.b16 %v363, %v362
    %v373 = vpack.c.b16 %v365, %v364
    %382 = vmatprep.subr.bf16.mxu0 0
    %383 = vmatpush1.bf16.msra.mxu0 %v366
    %384 = vmatprep.subr.bf16.mxu0 0
    %385 = vmatpush1.bf16.msra.mxu0 %v367
    %386 = vmatprep.subr.bf16.mxu0 0
    %387 = vmatpush1.bf16.msra.mxu0 %v368
    %388 = vmatprep.subr.bf16.mxu0 0
    %389 = vmatpush1.bf16.msra.mxu0 %v369
    %390 = vmatprep.subr.bf16.mxu0 0
    %391 = vmatpush1.bf16.msra.mxu0 %v370
    %392 = vmatprep.subr.bf16.mxu0 0
    %393 = vmatpush1.bf16.msra.mxu0 %v371
    %394 = vmatprep.subr.bf16.mxu0 0
    %395 = vmatpush1.bf16.msra.mxu0 %v372
    %396 = vmatprep.subr.bf16.mxu0 0
    %397 = vmatpush1.bf16.msra.mxu0 %v373
    %398 = vmatprep.subr.bf16.mxu0 0
    %399 = vmatpush1.bf16.msra.mxu0 0
    %400 = vmatprep.subr.bf16.mxu0 0
    %401 = vmatpush1.bf16.msra.mxu0 0
    %402 = vmatprep.subr.bf16.mxu0 0
    %403 = vmatpush1.bf16.msra.mxu0 0
    %404 = vmatprep.subr.bf16.mxu0 0
    %405 = vmatpush1.bf16.msra.mxu0 0
    %406 = vmatprep.subr.bf16.mxu0 0
    %407 = vmatpush1.bf16.msra.mxu0 0
    %408 = vmatprep.subr.bf16.mxu0 0
    %409 = vmatpush1.bf16.msra.mxu0 0
    %410 = vmatprep.subr.bf16.mxu0 0
    %411 = vmatpush1.bf16.msra.mxu0 0
    %412 = vmatprep.subr.bf16.mxu0 0
    %413 = vmatpush1.bf16.msra.mxu0 0
    %414 = vmatprep.mubr.bf16.mxu0 0
    %415 = vmatmul.mubr.bf16.gmra.mrb[0].mxu0 %v310
    %v416 = vpop.f32.mrb[0].mxu0
    %v417 = vadd.f32 %v332, %v416
    %v418 = vpop.f32.mrb[0].mxu0
    %v419 = vpop.f32.mrb[0].mxu0
    %v420 = vpop.f32.mrb[0].mxu0
    %421 = vdwg.mxu0
    %v422 = vmax.f32 %v417, 0.0
    %v423 = vpack.c.bf16 %v422, %v422
    %v424 = vld [vmem:[%s7] sm:$0xf]
    %v425 = vld [vmem:[%s7 + $0x4] sm:$0xf]
    %v426 = vld [vmem:[%s7 + $0x8] sm:$0xf]
    %v427 = vld [vmem:[%s7 + $0xc] sm:$0xf]
    %v428 = vld [vmem:[%s7 + $0x10] sm:$0xf]
    %v429 = vld [vmem:[%s7 + $0x14] sm:$0xf]
    %v430 = vld [vmem:[%s7 + $0x18] sm:$0xf]
    %v431 = vld [vmem:[%s7 + $0x1c] sm:$0xf]
    %v432 = vld [vmem:[%s8] sm:$0x1]
    %v434 = vlaneseq
    %v435 = vshrl.u32 %v434, 7
    %v436 = vsub.s32 0, %v435
    %v437 = vrot.slane %v432, %v436
    %v447 = vunpack.c.l.b16 %v424
    %v448 = vunpack.c.l.b16 %v425
    %v449 = vunpack.c.l.b16 %v426
    %v450 = vunpack.c.l.b16 %v427
    %v451 = vunpack.c.l.b16 %v428
    %v452 = vunpack.c.l.b16 %v429
    %v453 = vunpack.c.l.b16 %v430
    %v454 = vunpack.c.l.b16 %v431
    %v455 = vpack.c.b16 %v448, %v447
    %v456 = vpack.c.b16 %v450, %v449
    %v457 = vpack.c.b16 %v452, %v451
    %v458 = vpack.c.b16 %v454, %v453
    %vm463 = vcmask 523264
    %v465 = vsel %vm463, %v423, 0
    %467 = vmatprep.subr.bf16.mxu0 0
    %468 = vmatpush1.bf16.msra.mxu0 %v455
    %469 = vmatprep.subr.bf16.mxu0 0
    %470 = vmatpush1.bf16.msra.mxu0 %v456
    %471 = vmatprep.subr.bf16.mxu0 0
    %472 = vmatpush1.bf16.msra.mxu0 %v457
    %473 = vmatprep.subr.bf16.mxu0 0
    %474 = vmatpush1.bf16.msra.mxu0 %v458
    %475 = vmatprep.subr.bf16.mxu0 0
    %476 = vmatpush1.bf16.msra.mxu0 0
    %477 = vmatprep.subr.bf16.mxu0 0
    %478 = vmatpush1.bf16.msra.mxu0 0
    %479 = vmatprep.subr.bf16.mxu0 0
    %480 = vmatpush1.bf16.msra.mxu0 0
    %481 = vmatprep.subr.bf16.mxu0 0
    %482 = vmatpush1.bf16.msra.mxu0 0
    %483 = vmatprep.subr.bf16.mxu0 0
    %484 = vmatpush1.bf16.msra.mxu0 0
    %485 = vmatprep.subr.bf16.mxu0 0
    %486 = vmatpush1.bf16.msra.mxu0 0
    %487 = vmatprep.subr.bf16.mxu0 0
    %488 = vmatpush1.bf16.msra.mxu0 0
    %489 = vmatprep.subr.bf16.mxu0 0
    %490 = vmatpush1.bf16.msra.mxu0 0
    %491 = vmatprep.subr.bf16.mxu0 0
    %492 = vmatpush1.bf16.msra.mxu0 0
    %493 = vmatprep.subr.bf16.mxu0 0
    %494 = vmatpush1.bf16.msra.mxu0 0
    %495 = vmatprep.subr.bf16.mxu0 0
    %496 = vmatpush1.bf16.msra.mxu0 0
    %497 = vmatprep.subr.bf16.mxu0 0
    %498 = vmatpush1.bf16.msra.mxu0 0
    %499 = vmatprep.mubr.bf16.mxu0 0
    %500 = vmatmul.mubr.bf16.gmra.mrb[0].mxu0 %v465
    %v501 = vpop.f32.mrb[0].mxu0
    %v502 = vadd.f32 %v437, %v501
    %v503 = vpop.f32.mrb[0].mxu0
    %v504 = vpop.f32.mrb[0].mxu0
    %v505 = vpop.f32.mrb[0].mxu0
    %506 = vdwg.mxu0
    %vm507 = vcmask 23552
    %508 = vst.msk [vmem:[%s9] sm:$0xff] %vm507, %v502
    // Predicated region
    $region42: #{nba_deep_model_forward.1} parent=1 // pred_check
      _
    $region43: #{nba_deep_model_forward.1} parent=1 // pred_check_branch
      %510 = sbr.rel (0) target = $region45
    $region44: #{nba_deep_model_forward.1} parent=1 // pred_region
      _
    $region45: #{nba_deep_model_forward.1} parent=1 // pred_fallthru
      _
    // Predicated region
    $region46: #{nba_deep_model_forward.1} parent=1 // pred_check
      _
    $region47: #{nba_deep_model_forward.1} parent=1 // pred_check_branch
      %512 = sbr.rel (0) target = $region49
    $region48: #{nba_deep_model_forward.1} parent=1 // pred_region
      _
    $region49: #{nba_deep_model_forward.1} parent=1 // pred_fallthru
      _
    %513 = vsyncpa [#allocation3], 1

</llo_original>
